<compile_context>
chip_gen: v7x
topology: tpu7x:2x2x1
jax: 0.10.0
libtpu: 0.0.40
codegen_flags: <defaults>
</compile_context>

<pallas_src>
import jax
import jax.numpy as jnp
from jax.experimental import pallas as pl
from jax.experimental.pallas import tpu as pltpu

LANES = 128


def _bce_mean_kernel(n_ref, xt_ref, out_ref):
    """xt_ref: (2, R, 128) f32 — row 0 = logits, row 1 = target.
    n_ref: (1,) int32 in SMEM — number of valid (un-padded) elements.
    out_ref: (1, 1) f32 in SMEM — mean BCE loss."""
    n = n_ref[0]
    x = xt_ref[0]                      # (R, 128) logits
    t = xt_ref[1]                      # (R, 128) targets
    rows, lanes = x.shape

    # Mask out padded lanes (flat index >= n).
    flat_idx = (jax.lax.broadcasted_iota(jnp.int32, (rows, lanes), 0) * lanes
                + jax.lax.broadcasted_iota(jnp.int32, (rows, lanes), 1))
    valid = (flat_idx < n).astype(jnp.float32)

    # Element-wise binary cross-entropy (same as the torch reference: no clamping).
    elem = -t * jnp.log(x) - (1.0 - t) * jnp.log(1.0 - x)

    out_ref[0, 0] = jnp.sum(elem * valid) / n.astype(jnp.float32)


def bce_loss(logits, target):
    """JAX/Pallas port of BCELoss_.forward(logits, target)."""
    x = jnp.reshape(logits, (-1,)).astype(jnp.float32)
    t = jnp.reshape(target, (-1,)).astype(jnp.float32)
    n = x.shape[0]

    # Pad the flat length up to a whole number of (8, 128) f32 tiles.
    rows = max(8, ((-(-n // LANES)) + 7) // 8 * 8)
    padded = rows * LANES
    # Pad logits with 0.5 (finite log), target with 0.0; padded lanes are
    # masked to zero inside the kernel.
    x_pad = jnp.pad(x, (0, padded - n), constant_values=0.5)
    t_pad = jnp.pad(t, (0, padded - n), constant_values=0.0)
    stacked = jnp.stack([x_pad, t_pad]).reshape(2, rows, LANES)   # one input, one DMA

    n_arr = jnp.array([n], dtype=jnp.int32)

    out = pl.pallas_call(
        _bce_mean_kernel,
        out_shape=jax.ShapeDtypeStruct((1, 1), jnp.float32),
        in_specs=[
            pl.BlockSpec(memory_space=pltpu.MemorySpace.SMEM),   # n (scalar)
            pl.BlockSpec(memory_space=pltpu.MemorySpace.VMEM),   # stacked logits/target
        ],
        out_specs=pl.BlockSpec(memory_space=pltpu.MemorySpace.SMEM),
    )(n_arr, stacked)
    # TODO(synk): for very large N, switch to a (TILE_M, 128)-tiled grid with an
    # SMEM/VMEM accumulator finalized via pl.when(last) to stay HBM-bandwidth bound.
    return out[0, 0]


if __name__ == "__main__":
    key = jax.random.PRNGKey(0)
    k1, k2 = jax.random.split(key)

    # Small shapes consistent with an element-wise BCE over dense predictions.
    shape = (2, 4, 16, 16)
    # logits strictly inside (0, 1) so log() is finite, as the reference assumes.
    logits = jax.random.uniform(k1, shape, dtype=jnp.float32,
                                minval=0.05, maxval=0.95)
    target = (jax.random.uniform(k2, shape, dtype=jnp.float32) < 0.5).astype(jnp.float32)

    loss = bce_loss(logits, target)
    jax.block_until_ready(loss)

    # Sanity check against the plain-XLA reference.
    ref = jnp.mean(-target * jnp.log(logits) - (1.0 - target) * jnp.log(1.0 - logits))
    assert jnp.allclose(loss, ref, rtol=1e-3, atol=1e-5), (loss, ref)

    print("KERNEL_OK")
</pallas_src>

<mosaic_0001>
module attributes {stable_mosaic.version = 11 : i64} {
  func.func @_bce_mean_kernel(%arg0: memref<1xi32, #tpu.memory_space<smem>>, %arg1: memref<2x16x128xf32, #tpu.memory_space<vmem>>, %arg2: memref<1x1xf32, #tpu.memory_space<smem>>) attributes {dimension_semantics = [], scalar_prefetch = 0 : i64, scratch_operands = 0 : i64, tpu.core_type = #tpu.core_type<tc>} {
    %c0 = arith.constant 0 : index
    %0 = memref.load %arg0[%c0] : memref<1xi32, #tpu.memory_space<smem>>
    %c0_0 = arith.constant 0 : index
    %c0_1 = arith.constant 0 : index
    %c0_2 = arith.constant 0 : index
    %1 = vector.load %arg1[%c0_0, %c0_1, %c0_2] : memref<2x16x128xf32, #tpu.memory_space<vmem>>, vector<1x16x128xf32>
    %2 = vector.shape_cast %1 : vector<1x16x128xf32> to vector<16x128xf32>
    %c1 = arith.constant 1 : index
    %c0_3 = arith.constant 0 : index
    %c0_4 = arith.constant 0 : index
    %3 = vector.load %arg1[%c1, %c0_3, %c0_4] : memref<2x16x128xf32, #tpu.memory_space<vmem>>, vector<1x16x128xf32>
    %4 = vector.shape_cast %3 : vector<1x16x128xf32> to vector<16x128xf32>
    %5 = tpu.iota {dimensions = array<i32: 0>} : vector<16x128xi32>
    %c128_i32 = arith.constant 128 : i32
    %6 = vector.broadcast %c128_i32 : i32 to vector<16x128xi32>
    %7 = arith.muli %5, %6 : vector<16x128xi32>
    %8 = tpu.iota {dimensions = array<i32: 1>} : vector<16x128xi32>
    %9 = arith.addi %7, %8 : vector<16x128xi32>
    %10 = vector.broadcast %0 : i32 to vector<16x128xi32>
    %11 = arith.cmpi slt, %9, %10 : vector<16x128xi32>
    %12 = arith.extui %11 : vector<16x128xi1> to vector<16x128xi32>
    %13 = arith.sitofp %12 : vector<16x128xi32> to vector<16x128xf32>
    %cst = arith.constant 0.000000e+00 : f32
    %14 = vector.broadcast %cst : f32 to vector<16x128xf32>
    %15 = arith.subf %14, %4 : vector<16x128xf32>
    %16 = math.log %2 : vector<16x128xf32>
    %17 = arith.mulf %15, %16 : vector<16x128xf32>
    %cst_5 = arith.constant 1.000000e+00 : f32
    %18 = vector.broadcast %cst_5 : f32 to vector<16x128xf32>
    %19 = arith.subf %18, %4 : vector<16x128xf32>
    %cst_6 = arith.constant 1.000000e+00 : f32
    %20 = vector.broadcast %cst_6 : f32 to vector<16x128xf32>
    %21 = arith.subf %20, %2 : vector<16x128xf32>
    %22 = math.log %21 : vector<16x128xf32>
    %23 = arith.mulf %19, %22 : vector<16x128xf32>
    %24 = arith.subf %17, %23 : vector<16x128xf32>
    %25 = arith.mulf %24, %13 : vector<16x128xf32>
    %26 = vector.shape_cast %25 : vector<16x128xf32> to vector<1x16x128xf32>
    %cst_7 = arith.constant dense<0.000000e+00> : vector<1xf32>
    %27 = vector.multi_reduction <add>, %26, %cst_7 [1, 2] : vector<1x16x128xf32> to vector<1xf32>
    %28 = vector.shape_cast %27 : vector<1xf32> to vector<1x1x1xf32>
    %29 = vector.extract %28[0, 0, 0] : f32 from vector<1x1x1xf32>
    %30 = arith.sitofp %0 : i32 to f32
    %31 = arith.divf %29, %30 : f32
    %c0_8 = arith.constant 0 : index
    %c0_9 = arith.constant 0 : index
    %32 = memref.load %arg2[%c0_8, %c0_9] : memref<1x1xf32, #tpu.memory_space<smem>>
    memref.store %31, %arg2[%c0_8, %c0_9] : memref<1x1xf32, #tpu.memory_space<smem>>
    return
  }
}

</mosaic_0001>

<llo_original>
// kernel: tpu_custom_call.1
$region0: #{tpu_custom_call.1}
  #allocation0 [shape = 'u32[]', space=smem, size = 0x4, offset = 0x4, fixed_abs, tag = 'smem constant byte address 0x4 - core index']
  #allocation1 [shape = 'u32[144,128]{1,0:T(1,128)}', space=vmem, size = 0x12000, scoped, tag = 'internal scratch']
  #allocation2 [shape = 's32[1]{0:T(128)S(6)}', space=smem, size = 0x200, scoped, tag = 'scoped memory for tpu_custom_call.1']
  %s0 = inlined_call_operand.<no memory space> [shape: s32[1], index: 0, kind: input, shape index: {}]
  %s1 = inlined_call_operand.hbm [shape: f32[2,16,128], index: 1, kind: input, shape index: {}]
  %s2 = inlined_call_operand.hbm [shape: f32[1,1], index: 2, kind: output, shape index: {}]
  %s3 = sld [smem:[#allocation0]]
  $region22: #{tpu_custom_call.1} parent=0
    _
  %s5 = ssub.s32 1, %s3
  %s6 = scalar_select 0, %s5, %s3
  %7 = sst [smem:[#allocation2]] %s0
  $region1: #{tpu_custom_call.1} parent=0
    #allocation3 [shape = 'u8[16384]{0}', space=vmem, size = 0x4000, scoped, tag = 'input window, operand 1, single buffered']
    #allocation4 [shape = 's32[1]{0}', space=sflag, size = 0x4, scoped, tag = 'scoped memory for tpu_custom_call.1']
    #allocation5 [shape = 's32[1]{0}', space=sflag, size = 0x4, scoped, tag = 'scoped memory for tpu_custom_call.1']
    #allocation6 [shape = 'u8[512]{0}', space=smem, size = 0x200, scoped, tag = 'output window, operand 0, single buffered']
    %8 = vsyncpa [#allocation4], 0
    %9 = vsyncpa [#allocation5], 0
    // Predicated region
    $region2: #{tpu_custom_call.1} parent=1 // pred_check
      _
    $region3: #{tpu_custom_call.1} parent=1 // pred_check_branch
      %11 = sbr.rel (0) target = $region5
    $region4: #{tpu_custom_call.1} parent=1 // pred_region
      _
    $region5: #{tpu_custom_call.1} parent=1 // pred_fallthru
      _
    // Predicated region
    $region6: #{tpu_custom_call.1} parent=1 // pred_check
      _
    $region7: #{tpu_custom_call.1} parent=1 // pred_check_branch
      %13 = sbr.rel (0) target = $region9
    $region8: #{tpu_custom_call.1} parent=1 // pred_region
      %s15 = ssub.s32 512, 512
      %16 = vsyncadd [#allocation4], %s15
      %s17 = sshll.u32 [#allocation3], 4
      %s18 = int_to_ptr.vmem [resolvable:$true] %s17
      %23 = dma.hbm_to_vmem [thread:$0]  %s1, 512, %s18, [#allocation4], 128, 128, 8
    $region9: #{tpu_custom_call.1} parent=1 // pred_fallthru
      _
    // Predicated region
    $region10: #{tpu_custom_call.1} parent=1 // pred_check
      _
    $region11: #{tpu_custom_call.1} parent=1 // pred_check_branch
      %25 = sbr.rel (0) target = $region13
    $region12: #{tpu_custom_call.1} parent=1 // pred_region
      %26 = dma.done [#allocation4], 512
    $region13: #{tpu_custom_call.1} parent=1 // pred_fallthru
      _
    %s27 = sld [smem:[#allocation2]]
    %v28 = vld [vmem:[#allocation3] sm:$0xff]
    %v29 = vld [vmem:[#allocation3 + $0x8] sm:$0xff]
    %s30 = scalar_lea.vmem [#allocation3], 16
    %v31 = vld [vmem:[%s30] sm:$0xff]
    %v32 = vld [vmem:[%s30 + $0x8] sm:$0xff]
    %v33 = vlaneseq
    %v34 = vshrl.u32 %v33, 7
    %v35 = vadd.s32 %v34, 8
    %v36 = vmul.u32 %v34, 128
    %v37 = vmul.u32 %v35, 128
    %v38 = vlaneseq
    %v39 = vand.u32 %v38, 127
    %v40 = vadd.s32 %v36, %v39
    %v41 = vadd.s32 %v37, %v39
    %v42 = vstv %s27
    %vm43 = vcmp.lt.s32.totalorder %v40, %v42
    %vm44 = vcmp.lt.s32.totalorder %v41, %v42
    %v45 = vsel %vm43, 1, 0
    %v46 = vsel %vm44, 1, 0
    %v47 = vcvt.s32.f32 %v45
    %v48 = vcvt.s32.f32 %v46
    %v49 = vsub.f32 0.0, %v31
    %v50 = vsub.f32 0.0, %v32
    %v51 = vlog2.pop %v28
    %v52 = vmul.f32 %v51, 0.6931472
    %v53 = vlog2.pop %v29
    %v54 = vmul.f32 %v53, 0.6931472
    %v55 = vmul.f32 %v49, %v52
    %v56 = vmul.f32 %v50, %v54
    %v57 = vsub.f32 1.0, %v31
    %v58 = vsub.f32 1.0, %v32
    %v59 = vsub.f32 1.0, %v28
    %v60 = vsub.f32 1.0, %v29
    %v61 = vlog2.pop %v59
    %v62 = vmul.f32 %v61, 0.6931472
    %v63 = vlog2.pop %v60
    %v64 = vmul.f32 %v63, 0.6931472
    %v65 = vmul.f32 %v57, %v62
    %v66 = vmul.f32 %v58, %v64
    %v67 = vsub.f32 %v55, %v65
    %v68 = vsub.f32 %v56, %v66
    %v69 = vmul.f32 %v67, %v47
    %v70 = vmul.f32 %v68, %v48
    %v71 = vadd.f32 %v69, %v70
    %72 = vadd.xlane.f32.xlu0 %v71
    %v73 = vpop.xlane.xlu0 %72
    %v74 = vrot.slane %v73, 4
    %v75 = vadd.f32 %v73, %v74
    %v76 = vrot.slane %v75, 2
    %v77 = vadd.f32 %v75, %v76
    %v78 = vrot.slane %v77, 1
    %v79 = vadd.f32 %v77, %v78
    %s80 = vtos %v79
    %s81 = scvt.s32.f32 %s27
    %v82 = vstv %s81
    %v83 = vrcp.pop %v82
    %s84 = vtos %v83
    %s85 = smul.f32 %s80, %s84
    %s86 = scalar_lea.smem [#allocation6], 0
    %87 = sst [smem:[%s86]] %s85
    // Predicated region
    $region14: #{tpu_custom_call.1} parent=1 // pred_check
      _
    $region15: #{tpu_custom_call.1} parent=1 // pred_check_branch
      %89 = sbr.rel (0) target = $region17
    $region16: #{tpu_custom_call.1} parent=1 // pred_region
      %s91 = ssub.s32 16, 16
      %92 = vsyncadd [#allocation5], %s91
      %95 = dma.smem_to_hbm [#allocation6], 16, %s2, [#allocation5]
    $region17: #{tpu_custom_call.1} parent=1 // pred_fallthru
      _
    // Predicated region
    $region18: #{tpu_custom_call.1} parent=1 // pred_check
      _
    $region19: #{tpu_custom_call.1} parent=1 // pred_check_branch
      %97 = sbr.rel (0) target = $region21
    $region20: #{tpu_custom_call.1} parent=1 // pred_region
      %98 = dma.done [#allocation5], 16
    $region21: #{tpu_custom_call.1} parent=1 // pred_fallthru
      _
    %99 = sfence
    %100 = vsyncpa [#allocation4], 1
    %101 = vsyncpa [#allocation5], 1

</llo_original>
